<compile_context>
chip_gen: v7x
topology: tpu7x:2x2x1
jax: 0.10.0
libtpu: 0.0.40
codegen_flags: <defaults>
</compile_context>

<pallas_src>
import functools
import math

import jax
import jax.numpy as jnp
from jax.experimental import pallas as pl
from jax.experimental.pallas import tpu as pltpu

_EPS = 1e-12          # F.normalize default eps
_EPS2 = _EPS * _EPS   # compared against the squared norm so we can use rsqrt


def _round_up(v, mult):
    return ((v + mult - 1) // mult) * mult


def _normalize_weight_tile(w_ref, wn_ref):
    """Normalize the resident (TC, E) weight tile once per class tile (inner i == 0)."""
    @pl.when(pl.program_id(1) == 0)
    def _():
        w = w_ref[...].astype(jnp.float32)
        inv_w = jax.lax.rsqrt(
            jnp.maximum(jnp.sum(w * w, axis=-1, keepdims=True), _EPS2))
        wn_ref[...] = (w * inv_w).astype(wn_ref.dtype)


def _cosine_from_tiles(x_ref, wn_ref, matmul_dtype):
    """cosine tile = normalize(x) @ normalized_w^T, f32 accumulation on the MXU."""
    x = x_ref[...].astype(jnp.float32)                          # (TB, E)
    inv_x = jax.lax.rsqrt(
        jnp.maximum(jnp.sum(x * x, axis=-1, keepdims=True), _EPS2))
    xn = (x * inv_x).astype(matmul_dtype)                       # (TB, E)
    return jax.lax.dot_general(
        xn, wn_ref[...],
        dimension_numbers=(((1,), (1,)), ((), ())),             # contract E; no transpose
        preferred_element_type=jnp.float32,
    )                                                           # (TB, TC) f32


def _cosine_kernel(x_ref, w_ref, o_ref, wn_ref, *, matmul_dtype):
    _normalize_weight_tile(w_ref, wn_ref)
    o_ref[...] = _cosine_from_tiles(x_ref, wn_ref, matmul_dtype)


def _arcface_kernel(label_ref, x_ref, w_ref, o_ref, wn_ref, *,
                    s, cos_m, sin_m, tc, matmul_dtype):
    _normalize_weight_tile(w_ref, wn_ref)
    cosine = _cosine_from_tiles(x_ref, wn_ref, matmul_dtype)

    j = pl.program_id(0)                          # class-tile index (outer axis)
    label = label_ref[...]                        # (TB, 1) int32, -1 => no margin
    col = jax.lax.broadcasted_iota(jnp.int32, cosine.shape, 1) + j * tc
    is_target = (col == label) & (label != -1)

    # cos(acos(c) + m) == c*cos(m) - sqrt(1 - c^2)*sin(m); pass-through elsewhere.
    sine = jnp.sqrt(jnp.maximum(1.0 - cosine * cosine, 0.0))
    phi = cosine * jnp.float32(cos_m) - sine * jnp.float32(sin_m)
    o_ref[...] = jnp.where(is_target, phi, cosine) * jnp.float32(s)


def arcface_forward(x, weight, label=None, *, s=64.0, m=0.5, tb=256, tc=512,
                    matmul_dtype=jnp.float32):
    """ArcFace forward.  x: (B, E); weight: (C, E); label: (B,) int32 or None.

    tb / tc: batch / class tile sizes (multiples of 8 / 128, clipped to the padded
    problem).  The wrapper pads B and C and slices the result back.
    """
    B, E = x.shape
    C, E2 = weight.shape
    assert E == E2

    TB = min(int(tb), _round_up(B, 8))
    TC = min(int(tc), _round_up(C, 128))
    Bp = _round_up(B, TB)
    Cp = _round_up(C, TC)

    x_p = jnp.pad(x, ((0, Bp - B), (0, 0))) if Bp != B else x
    w_p = jnp.pad(weight, ((0, Cp - C), (0, 0))) if Cp != C else weight

    grid = (Cp // TC, Bp // TB)   # C tiles outer => each weight tile DMA'd once
    x_spec = pl.BlockSpec((TB, E), lambda j, i: (i, 0))
    w_spec = pl.BlockSpec((TC, E), lambda j, i: (j, 0))   # invariant in i => resident
    o_spec = pl.BlockSpec((TB, TC), lambda j, i: (i, j))
    scratch = [pltpu.VMEM((TC, E), matmul_dtype)]          # normalized weight tile

    out_shape = jax.ShapeDtypeStruct((Bp, Cp), jnp.float32)
    compiler_params = pltpu.CompilerParams(
        dimension_semantics=("parallel", "arbitrary"))
    cost = pl.CostEstimate(
        flops=2 * B * C * E,
        transcendentals=B * C + B + C,
        bytes_accessed=4 * (B * E + C * E + B * C),
    )

    if label is None:
        out = pl.pallas_call(
            functools.partial(_cosine_kernel, matmul_dtype=matmul_dtype),
            out_shape=out_shape,
            grid=grid,
            in_specs=[x_spec, w_spec],
            out_specs=o_spec,
            scratch_shapes=scratch,
            compiler_params=compiler_params,
            cost_estimate=cost,
        )(x_p, w_p)
    else:
        label_p = jnp.full((Bp, 1), -1, jnp.int32)
        label_p = label_p.at[:B, 0].set(label.astype(jnp.int32))
        l_spec = pl.BlockSpec((TB, 1), lambda j, i: (i, 0))
        out = pl.pallas_call(
            functools.partial(_arcface_kernel, s=float(s),
                              cos_m=math.cos(float(m)), sin_m=math.sin(float(m)),
                              tc=TC, matmul_dtype=matmul_dtype),
            out_shape=out_shape,
            grid=grid,
            in_specs=[l_spec, x_spec, w_spec],
            out_specs=o_spec,
            scratch_shapes=scratch,
            compiler_params=compiler_params,
            cost_estimate=cost,
        )(label_p, x_p, w_p)

    if Bp != B or Cp != C:
        out = out[:B, :C]
    return out


def _reference(x, weight, label=None, *, s=64.0, m=0.5):
    """Pure-JAX reference mirroring the PyTorch semantics (acos / cos path)."""
    xn = x / jnp.maximum(jnp.linalg.norm(x, axis=-1, keepdims=True), _EPS)
    wn = weight / jnp.maximum(jnp.linalg.norm(weight, axis=-1, keepdims=True), _EPS)
    cosine = jnp.matmul(xn, wn.T, precision=jax.lax.Precision.HIGHEST)
    if label is None:
        return cosine
    Bn, Cn = cosine.shape
    col = jax.lax.broadcasted_iota(jnp.int32, (Bn, Cn), 1)
    m_hot = jnp.where((col == label[:, None]) & (label[:, None] != -1), m, 0.0)
    return jnp.cos(jnp.arccos(jnp.clip(cosine, -1.0, 1.0)) + m_hot) * s


def _xavier_uniform(key, nclass, nembed):
    bound = (6.0 / (nclass + nembed)) ** 0.5
    return jax.random.uniform(key, (nclass, nembed), jnp.float32, -bound, bound)


if __name__ == "__main__":
    B, E, C = 12, 40, 300          # batch, nembed, nclass (small, non-aligned on purpose)
    s_val, m_val = 64.0, 0.5

    key = jax.random.PRNGKey(0)
    kx, kw, kl = jax.random.split(key, 3)
    x = jax.random.normal(kx, (B, E), jnp.float32)
    weight = _xavier_uniform(kw, C, E)
    label = jax.random.randint(kl, (B,), 0, C, jnp.int32)
    label = label.at[0].set(-1)    # exercise the label == -1 (no margin) path

    # Multi-tile (padded) path: forces 2 batch tiles x 3 class tiles.
    cos_out = arcface_forward(x, weight, None, s=s_val, m=m_val, tb=8, tc=128)
    logits = arcface_forward(x, weight, label, s=s_val, m=m_val, tb=8, tc=128)
    # Default tile sizes collapse to a single (padded) tile; exercises that path too.
    logits_1t = arcface_forward(x, weight, label, s=s_val, m=m_val)
    jax.block_until_ready((cos_out, logits, logits_1t))

    ref_cos = _reference(x, weight, None, s=s_val, m=m_val)
    ref_logits = _reference(x, weight, label, s=s_val, m=m_val)

    assert cos_out.shape == (B, C) and logits.shape == (B, C)
    assert jnp.allclose(cos_out, ref_cos, atol=1e-5, rtol=1e-5)
    assert jnp.allclose(logits, ref_logits, atol=1e-3, rtol=1e-3)
    assert jnp.allclose(logits_1t, ref_logits, atol=1e-3, rtol=1e-3)

    print("KERNEL_OK")
</pallas_src>

<mosaic_0001>
module attributes {stable_mosaic.version = 11 : i64} {
  func.func @_cosine_kernel(%arg0: i32, %arg1: i32, %arg2: memref<8x40xf32, #tpu.memory_space<vmem>>, %arg3: memref<128x40xf32, #tpu.memory_space<vmem>>, %arg4: memref<8x128xf32, #tpu.memory_space<vmem>>, %arg5: memref<128x40xf32, #tpu.memory_space<vmem>>) attributes {dimension_semantics = [#tpu.dimension_semantics<parallel>, #tpu.dimension_semantics<arbitrary>], iteration_bounds = array<i64: 3, 2>, scalar_prefetch = 0 : i64, scratch_operands = 1 : i64, tpu.core_type = #tpu.core_type<tc>, window_params = [{transform_indices = @transform_0, window_bounds = array<i64: 8, 40>}, {transform_indices = @transform_1, window_bounds = array<i64: 128, 40>}, {transform_indices = @transform_2, window_bounds = array<i64: 8, 128>}]} {
    %c0_i32 = arith.constant 0 : i32
    %0 = arith.cmpi eq, %arg1, %c0_i32 : i32
    %1 = arith.extui %0 : i1 to i32
    %c0_i32_0 = arith.constant 0 : i32
    %2 = arith.cmpi ne, %1, %c0_i32_0 : i32
    scf.if %2 {
      %c0_8 = arith.constant 0 : index
      %c0_9 = arith.constant 0 : index
      %15 = vector.load %arg3[%c0_8, %c0_9] : memref<128x40xf32, #tpu.memory_space<vmem>>, vector<128x40xf32>
      %16 = arith.mulf %15, %15 : vector<128x40xf32>
      %cst_10 = arith.constant dense<0.000000e+00> : vector<128xf32>
      %17 = vector.multi_reduction <add>, %16, %cst_10 [1] : vector<128x40xf32> to vector<128xf32>
      %18 = vector.shape_cast %17 : vector<128xf32> to vector<128x1xf32>
      %cst_11 = arith.constant 1.000000e-24 : f32
      %19 = vector.broadcast %cst_11 : f32 to vector<128x1xf32>
      %20 = arith.maximumf %18, %19 : vector<128x1xf32>
      %21 = math.rsqrt %20 : vector<128x1xf32>
      %22 = vector.broadcast %21 : vector<128x1xf32> to vector<128x40xf32>
      %23 = arith.mulf %15, %22 : vector<128x40xf32>
      %c0_12 = arith.constant 0 : index
      %c0_13 = arith.constant 0 : index
      %24 = vector.load %arg5[%c0_12, %c0_13] : memref<128x40xf32, #tpu.memory_space<vmem>>, vector<128x40xf32>
      tpu.vector_store %arg5[%c0_12, %c0_13], %23 {strides = array<i32>} : memref<128x40xf32, #tpu.memory_space<vmem>>, vector<128x40xf32>,
    } else {
    }
    %c0 = arith.constant 0 : index
    %c0_1 = arith.constant 0 : index
    %3 = vector.load %arg2[%c0, %c0_1] : memref<8x40xf32, #tpu.memory_space<vmem>>, vector<8x40xf32>
    %4 = arith.mulf %3, %3 : vector<8x40xf32>
    %cst = arith.constant dense<0.000000e+00> : vector<8xf32>
    %5 = vector.multi_reduction <add>, %4, %cst [1] : vector<8x40xf32> to vector<8xf32>
    %6 = vector.shape_cast %5 : vector<8xf32> to vector<8x1xf32>
    %cst_2 = arith.constant 1.000000e-24 : f32
    %7 = vector.broadcast %cst_2 : f32 to vector<8x1xf32>
    %8 = arith.maximumf %6, %7 : vector<8x1xf32>
    %9 = math.rsqrt %8 : vector<8x1xf32>
    %10 = vector.broadcast %9 : vector<8x1xf32> to vector<8x40xf32>
    %11 = arith.mulf %3, %10 : vector<8x40xf32>
    %c0_3 = arith.constant 0 : index
    %c0_4 = arith.constant 0 : index
    %12 = vector.load %arg5[%c0_3, %c0_4] : memref<128x40xf32, #tpu.memory_space<vmem>>, vector<128x40xf32>
    %cst_5 = arith.constant dense<0.000000e+00> : vector<8x128xf32>
    %13 = tpu.matmul %11, %12, %cst_5 {dimension_numbers = #tpu.dot_dimension_numbers<[1], [1], [0], [0], [0, 0, 1, 0], [], []>} : vector<8x40xf32>, vector<128x40xf32>, vector<8x128xf32> -> vector<8x128xf32>
    %c0_6 = arith.constant 0 : index
    %c0_7 = arith.constant 0 : index
    %14 = vector.load %arg4[%c0_6, %c0_7] : memref<8x128xf32, #tpu.memory_space<vmem>>, vector<8x128xf32>
    tpu.vector_store %arg4[%c0_6, %c0_7], %13 {strides = array<i32>} : memref<8x128xf32, #tpu.memory_space<vmem>>, vector<8x128xf32>,
    return
  }
  func.func @transform_0(%arg0: i32, %arg1: i32) -> (i32, i32) {
    %c0_i32 = arith.constant 0 : i32
    %c0_i32_0 = arith.constant 0 : i32
    return %arg1, %c0_i32 : i32, i32
  }
  func.func @transform_1(%arg0: i32, %arg1: i32) -> (i32, i32) {
    %c0_i32 = arith.constant 0 : i32
    %c0_i32_0 = arith.constant 0 : i32
    return %arg0, %c0_i32 : i32, i32
  }
  func.func @transform_2(%arg0: i32, %arg1: i32) -> (i32, i32) {
    %c0_i32 = arith.constant 0 : i32
    return %arg1, %arg0 : i32, i32
  }
}

</mosaic_0001>

<llo_original>
// kernel: tpu_custom_call.1
$region0: #{tpu_custom_call.1}
  #allocation0 [shape = 'u32[]', space=smem, size = 0x4, offset = 0x4, fixed_abs, tag = 'smem constant byte address 0x4 - core index']
  #allocation1 [shape = 'u32[144,128]{1,0:T(1,128)}', space=vmem, size = 0x12000, scoped, tag = 'internal scratch']
  #allocation2 [shape = 'f32[128,40]{1,0:T(8,128)}', space=vmem, size = 0x10000, scoped, tag = 'scratch operand']
  %s0 = inlined_call_operand.vmem [shape: f32[16,40], index: 0, kind: input, shape index: {}]
  %s1 = inlined_call_operand.vmem [shape: f32[384,40], index: 1, kind: input, shape index: {}]
  %s2 = inlined_call_operand.hbm [shape: f32[16,384], index: 2, kind: output, shape index: {}]
  %s3 = sld [smem:[#allocation0]]
  $region45: #{tpu_custom_call.1} parent=0
    _
  %s5 = ssub.s32 1, %s3
  %s6 = scalar_select 0, %s5, %s3
  $region1: #{tpu_custom_call.1} parent=0
    #allocation3 [shape = 'u8[8192]{0}', space=vmem, size = 0x2000, scoped, tag = 'output window, operand 0']
    #allocation4 [shape = 's32[2]{0}', space=sflag, size = 0x8, scoped, tag = 'scoped memory for tpu_custom_call.1']
    %7 = vsyncpa [#allocation4], 0
    %s8 = scalar_lea.sflag [#allocation4], 1
    %9 = vsyncpa %s8, 0
    loop: start=0, step=1, limit=8
    $region2: #{tpu_custom_call.1} parent=1 // loop_pre_header
      _
    $region3: #{tpu_custom_call.1} parent=1 // loop_header
      %s11 = sphi 0, %s15
      %p12 = scmp.ge.s32.totalorder %s11, 8
      %s18 = sphi 0, %s30
      %s19 = sphi 0, %s26
      %s20 = sphi 0, %s18
      %s21 = sphi 0, %s19
      %s22 = sphi 0, %s20
      %s23 = sphi 0, %s21
      %s33 = sphi 0, %s35
      %s36 = sphi 0, %s33
      %s37 = sphi 0, %s36
      %s53 = sphi 0, %s37
      %s59 = sphi 0, %s61
      %s62 = sphi 0, %s59
      %s63 = sphi 0, %s62
      %s79 = sphi 0, %s63
      %s87 = sphi 0, %s89
      %s90 = sphi 0, %s87
      %s91 = sphi 0, %s90
      %s107 = sphi 0, %s91
    $region4: #{tpu_custom_call.1} parent=1 // loop_header_branch
      %14 = sbr.rel (%p12) target = $region8
    $region5: #{tpu_custom_call.1} parent=1 // loop_body
      %s16 = ssub.s32 %s11, 1
      %s17 = ssub.s32 %s11, 2
      %s24 = sadd.s32 1, %s19
      %p25 = scmp.ge.s32.totalorder %s24, 2
      %s26 = scalar_select %p25, 0, %s24
      %s27 = sadd.s32 1, %s18
      %s28 = scalar_select %p25, %s27, %s18
      %p29 = scmp.ge.s32.totalorder %s28, 3
      %s30 = scalar_select %p29, 0, %s28
      %s31 = ssub.s32 %s19, %s26
      %p32 = scmp.eq.s32.totalorder %s31, 0
      %s34 = sadd.s32 %s33, 1
      %s35 = scalar_select %p32, %s33, %s34
      %p38 = pneg %p32
      %p39 = scmp.eq.s32.totalorder %s11, 5
      %p40 = por %p38, %p39
      %p41 = scmp.ne.s32.totalorder %s33, %s36
      %p42 = scmp.eq.s32.totalorder %s11, 0
      %p43 = por %p41, %p42
      %p44 = scmp.ne.s32.totalorder %s33, %s36
      %p45 = scmp.eq.s32.totalorder %s16, 5
      %p46 = por %p44, %p45
      %p47 = scmp.ne.s32.totalorder %s36, %s37
      %p48 = scmp.eq.s32.totalorder %s16, 0
      %p49 = por %p47, %p48
      %p50 = scmp.ne.s32.totalorder %s36, %s37
      %p51 = scmp.eq.s32.totalorder %s17, 5
      %p52 = por %p50, %p51
      %p54 = scmp.ne.s32.totalorder %s37, %s53
      %p55 = scmp.eq.s32.totalorder %s17, 0
      %p56 = por %p54, %p55
      %s57 = ssub.s32 %s18, %s30
      %p58 = scmp.eq.s32.totalorder %s57, 0
      %s60 = sadd.s32 %s59, 1
      %s61 = scalar_select %p58, %s59, %s60
      %p64 = pneg %p58
      %p65 = scmp.eq.s32.totalorder %s11, 5
      %p66 = por %p64, %p65
      %p67 = scmp.ne.s32.totalorder %s59, %s62
      %p68 = scmp.eq.s32.totalorder %s11, 0
      %p69 = por %p67, %p68
      %p70 = scmp.ne.s32.totalorder %s59, %s62
      %p71 = scmp.eq.s32.totalorder %s16, 5
      %p72 = por %p70, %p71
      %p73 = scmp.ne.s32.totalorder %s62, %s63
      %p74 = scmp.eq.s32.totalorder %s16, 0
      %p75 = por %p73, %p74
      %p76 = scmp.ne.s32.totalorder %s62, %s63
      %p77 = scmp.eq.s32.totalorder %s17, 5
      %p78 = por %p76, %p77
      %p80 = scmp.ne.s32.totalorder %s63, %s79
      %p81 = scmp.eq.s32.totalorder %s17, 0
      %p82 = por %p80, %p81
      %s83 = ssub.s32 %s19, %s26
      %s84 = ssub.s32 %s18, %s30
      %s85 = sor.u32 %s83, %s84
      %p86 = scmp.eq.s32.totalorder %s85, 0
      %s88 = sadd.s32 %s87, 1
      %s89 = scalar_select %p86, %s87, %s88
      %p92 = pneg %p86
      %p93 = scmp.eq.s32.totalorder %s11, 5
      %p94 = por %p92, %p93
      %p95 = scmp.ne.s32.totalorder %s87, %s90
      %p96 = scmp.eq.s32.totalorder %s11, 0
      %p97 = por %p95, %p96
      %p98 = scmp.ne.s32.totalorder %s87, %s90
      %p99 = scmp.eq.s32.totalorder %s16, 5
      %p100 = por %p98, %p99
      %p101 = scmp.ne.s32.totalorder %s90, %s91
      %p102 = scmp.eq.s32.totalorder %s16, 0
      %p103 = por %p101, %p102
      %p104 = scmp.ne.s32.totalorder %s90, %s91
      %p105 = scmp.eq.s32.totalorder %s17, 5
      %p106 = por %p104, %p105
      %p108 = scmp.ne.s32.totalorder %s91, %s107
      %p109 = scmp.eq.s32.totalorder %s17, 0
      %p110 = por %p108, %p109
      %p111 = scmp.le.s32.totalorder 1, %s11
      %p112 = scmp.lt.s32.totalorder %s11, 7
      %p113 = pnand %p111, %p112
      %p114 = pneg %p113
      // Predicated region
      $region9: #{tpu_custom_call.1} parent=5 // pred_check
        _
      $region10: #{tpu_custom_call.1} parent=5 // pred_check_branch
        %116 = sbr.rel (%p113) target = $region12
      $region11: #{tpu_custom_call.1} parent=5 // pred_region
        %s117 = ssub.s32 %s11, 1
      $region12: #{tpu_custom_call.1} parent=5 // pred_fallthru
        _
      %p118 = scmp.lt.s32.totalorder %s11, 6
      // Predicated region
      $region13: #{tpu_custom_call.1} parent=5 // pred_check
        %p119 = pneg %p118
      $region14: #{tpu_custom_call.1} parent=5 // pred_check_branch
        %121 = sbr.rel (%p119) target = $region16
      $region15: #{tpu_custom_call.1} parent=5 // pred_region
        // Predicated region
        $region17: #{tpu_custom_call.1} parent=15 // pred_check
          %p122 = pneg %p43
        $region18: #{tpu_custom_call.1} parent=15 // pred_check_branch
          %124 = sbr.rel (%p122) target = $region20
        $region19: #{tpu_custom_call.1} parent=15 // pred_region
          %p125 = scmp.lt.s32.totalorder %s19, 1
          %s126 = scalar_select %p125, %s19, 1
          %s127 = smul.addr %s126, 8
          %s128 = scalar_lea.vmem %s0, %s127
        $region20: #{tpu_custom_call.1} parent=15 // pred_fallthru
          _
        // Predicated region
        $region21: #{tpu_custom_call.1} parent=15 // pred_check
          %p129 = pneg %p69
        $region22: #{tpu_custom_call.1} parent=15 // pred_check_branch
          %131 = sbr.rel (%p129) target = $region24
        $region23: #{tpu_custom_call.1} parent=15 // pred_region
          %s132 = smul.u32 16, %s18
          %p133 = scmp.lt.s32.totalorder %s132, 47
          %s134 = scalar_select %p133, %s132, 47
          %s135 = smul.addr %s134, 8
          %s136 = scalar_lea.vmem %s1, %s135
          %s137 = smul.u32 16, %s18
        $region24: #{tpu_custom_call.1} parent=15 // pred_fallthru
          _
      $region16: #{tpu_custom_call.1} parent=5 // pred_fallthru
        _
      %p138 = scmp.le.s32.totalorder 1, %s11
      %p139 = scmp.lt.s32.totalorder %s11, 7
      %p140 = pnand %p138, %p139
      %p141 = pneg %p140
      // Predicated region
      $region25: #{tpu_custom_call.1} parent=5 // pred_check
        _
      $region26: #{tpu_custom_call.1} parent=5 // pred_check_branch
        %143 = sbr.rel (%p140) target = $region28
      $region27: #{tpu_custom_call.1} parent=5 // pred_region
        %s144 = ssub.s32 %s11, 1
        %p145 = scmp.lt.s32.totalorder %s21, 1
        %s146 = scalar_select %p145, %s21, 1
        %s147 = smul.addr %s146, 8
        %s148 = scalar_lea.vmem %s0, %s147
        %p149 = pneg %p49
        %p150 = pneg %p46
        %s151 = smul.u32 16, %s20
        %p152 = scmp.lt.s32.totalorder %s151, 47
        %s153 = scalar_select %p152, %s151, 47
        %s154 = smul.addr %s153, 8
        %s155 = scalar_lea.vmem %s1, %s154
        %p156 = pneg %p75
        %p157 = pneg %p72
        %p158 = pneg %p103
        %p159 = pneg %p100
        %s160 = sand.u32 %s90, 1
        %s161 = scalar_lea.sflag [#allocation4], %s160
        %s162 = sand.u32 %s90, 1
        %s163 = smul.addr %s162, 8
        %s164 = scalar_lea.vmem [#allocation3], %s163
        %p165 = scmp.lt.s32.totalorder %s21, 1
        %s166 = scalar_select %p165, %s21, 1
        %s167 = smul.addr %s166, 8
        %s168 = scalar_lea.vmem %s0, %s167
        %s169 = smul.u32 16, %s20
        %p170 = scmp.lt.s32.totalorder %s169, 47
        %s171 = scalar_select %p170, %s169, 47
        %s172 = smul.addr %s171, 8
        %s173 = scalar_lea.vmem %s1, %s172
        %s174 = smul.u32 16, %s20
        %p175 = scmp.eq.s32.totalorder %s21, 0
        // Predicated region
        $region29: #{tpu_custom_call.1} parent=27 // pred_check
          %p176 = pneg %p175
        $region30: #{tpu_custom_call.1} parent=27 // pred_check_branch
          %178 = sbr.rel (%p176) target = $region32
        $region31: #{tpu_custom_call.1} parent=27 // pred_region
          %v179 = vld [vmem:[%s173] sm:$0xff]
          %v180 = vld [vmem:[%s173 + $0x8] sm:$0xff]
          %v181 = vld [vmem:[%s173 + $0x10] sm:$0xff]
          %v182 = vld [vmem:[%s173 + $0x18] sm:$0xff]
          %v183 = vld [vmem:[%s173 + $0x20] sm:$0xff]
          %v184 = vld [vmem:[%s173 + $0x28] sm:$0xff]
          %v185 = vld [vmem:[%s173 + $0x30] sm:$0xff]
          %v186 = vld [vmem:[%s173 + $0x38] sm:$0xff]
          %v187 = vld [vmem:[%s173 + $0x40] sm:$0xff]
          %v188 = vld [vmem:[%s173 + $0x48] sm:$0xff]
          %v189 = vld [vmem:[%s173 + $0x50] sm:$0xff]
          %v190 = vld [vmem:[%s173 + $0x58] sm:$0xff]
          %v191 = vld [vmem:[%s173 + $0x60] sm:$0xff]
          %v192 = vld [vmem:[%s173 + $0x68] sm:$0xff]
          %v193 = vld [vmem:[%s173 + $0x70] sm:$0xff]
          %v194 = vld [vmem:[%s173 + $0x78] sm:$0xff]
          %v195 = vmul.f32 %v179, %v179
          %v196 = vmul.f32 %v180, %v180
          %v197 = vmul.f32 %v181, %v181
          %v198 = vmul.f32 %v182, %v182
          %v199 = vmul.f32 %v183, %v183
          %v200 = vmul.f32 %v184, %v184
          %v201 = vmul.f32 %v185, %v185
          %v202 = vmul.f32 %v186, %v186
          %v203 = vmul.f32 %v187, %v187
          %v204 = vmul.f32 %v188, %v188
          %v205 = vmul.f32 %v189, %v189
          %v206 = vmul.f32 %v190, %v190
          %v207 = vmul.f32 %v191, %v191
          %v208 = vmul.f32 %v192, %v192
          %v209 = vmul.f32 %v193, %v193
          %v210 = vmul.f32 %v194, %v194
          %vm211 = vcmask 326656
          %v212 = vsel %vm211, %v195, 0.0
          %213 = vadd.xlane.f32.xlu0 %v212
          %v214 = vpop.xlane.xlu0 %213
          %v215 = vsel %vm211, %v196, 0.0
          %216 = vadd.xlane.f32.xlu0 %v215
          %v217 = vpop.xlane.xlu0 %216
          %v218 = vsel %vm211, %v197, 0.0
          %219 = vadd.xlane.f32.xlu0 %v218
          %v220 = vpop.xlane.xlu0 %219
          %v221 = vsel %vm211, %v198, 0.0
          %222 = vadd.xlane.f32.xlu0 %v221
          %v223 = vpop.xlane.xlu0 %222
          %v224 = vsel %vm211, %v199, 0.0
          %225 = vadd.xlane.f32.xlu0 %v224
          %v226 = vpop.xlane.xlu0 %225
          %v227 = vsel %vm211, %v200, 0.0
          %228 = vadd.xlane.f32.xlu0 %v227
          %v229 = vpop.xlane.xlu0 %228
          %v230 = vsel %vm211, %v201, 0.0
          %231 = vadd.xlane.f32.xlu0 %v230
          %v232 = vpop.xlane.xlu0 %231
          %v233 = vsel %vm211, %v202, 0.0
          %234 = vadd.xlane.f32.xlu0 %v233
          %v235 = vpop.xlane.xlu0 %234
          %v236 = vsel %vm211, %v203, 0.0
          %237 = vadd.xlane.f32.xlu0 %v236
          %v238 = vpop.xlane.xlu0 %237
          %v239 = vsel %vm211, %v204, 0.0
          %240 = vadd.xlane.f32.xlu0 %v239
          %v241 = vpop.xlane.xlu0 %240
          %v242 = vsel %vm211, %v205, 0.0
          %243 = vadd.xlane.f32.xlu0 %v242
          %v244 = vpop.xlane.xlu0 %243
          %v245 = vsel %vm211, %v206, 0.0
          %246 = vadd.xlane.f32.xlu0 %v245
          %v247 = vpop.xlane.xlu0 %246
          %v248 = vsel %vm211, %v207, 0.0
          %249 = vadd.xlane.f32.xlu0 %v248
          %v250 = vpop.xlane.xlu0 %249
          %v251 = vsel %vm211, %v208, 0.0
          %252 = vadd.xlane.f32.xlu0 %v251
          %v253 = vpop.xlane.xlu0 %252
          %v254 = vsel %vm211, %v209, 0.0
          %255 = vadd.xlane.f32.xlu0 %v254
          %v256 = vpop.xlane.xlu0 %255
          %v257 = vsel %vm211, %v210, 0.0
          %258 = vadd.xlane.f32.xlu0 %v257
          %v259 = vpop.xlane.xlu0 %258
          %v260 = vmax.f32 %v214, 1e-24
          %v261 = vmax.f32 %v217, 1e-24
          %v262 = vmax.f32 %v220, 1e-24
          %v263 = vmax.f32 %v223, 1e-24
          %v264 = vmax.f32 %v226, 1e-24
          %v265 = vmax.f32 %v229, 1e-24
          %v266 = vmax.f32 %v232, 1e-24
          %v267 = vmax.f32 %v235, 1e-24
          %v268 = vmax.f32 %v238, 1e-24
          %v269 = vmax.f32 %v241, 1e-24
          %v270 = vmax.f32 %v244, 1e-24
          %v271 = vmax.f32 %v247, 1e-24
          %v272 = vmax.f32 %v250, 1e-24
          %v273 = vmax.f32 %v253, 1e-24
          %v274 = vmax.f32 %v256, 1e-24
          %v275 = vmax.f32 %v259, 1e-24
          %v276 = vrsqrt.pop %v260
          %v277 = vrsqrt.pop %v261
          %v278 = vrsqrt.pop %v262
          %v279 = vrsqrt.pop %v263
          %v280 = vrsqrt.pop %v264
          %v281 = vrsqrt.pop %v265
          %v282 = vrsqrt.pop %v266
          %v283 = vrsqrt.pop %v267
          %v284 = vrsqrt.pop %v268
          %v285 = vrsqrt.pop %v269
          %v286 = vrsqrt.pop %v270
          %v287 = vrsqrt.pop %v271
          %v288 = vrsqrt.pop %v272
          %v289 = vrsqrt.pop %v273
          %v290 = vrsqrt.pop %v274
          %v291 = vrsqrt.pop %v275
          %v292 = vmul.f32 %v179, %v276
          %v293 = vmul.f32 %v180, %v277
          %v294 = vmul.f32 %v181, %v278
          %v295 = vmul.f32 %v182, %v279
          %v296 = vmul.f32 %v183, %v280
          %v297 = vmul.f32 %v184, %v281
          %v298 = vmul.f32 %v185, %v282
          %v299 = vmul.f32 %v186, %v283
          %v300 = vmul.f32 %v187, %v284
          %v301 = vmul.f32 %v188, %v285
          %v302 = vmul.f32 %v189, %v286
          %v303 = vmul.f32 %v190, %v287
          %v304 = vmul.f32 %v191, %v288
          %v305 = vmul.f32 %v192, %v289
          %v306 = vmul.f32 %v193, %v290
          %v307 = vmul.f32 %v194, %v291
          %308 = vst.msk [vmem:[#allocation2] sm:$0xff] %vm211, %v292
          %309 = vst.msk [vmem:[#allocation2 + $0x8] sm:$0xff] %vm211, %v293
          %310 = vst.msk [vmem:[#allocation2 + $0x10] sm:$0xff] %vm211, %v294
          %311 = vst.msk [vmem:[#allocation2 + $0x18] sm:$0xff] %vm211, %v295
          %312 = vst.msk [vmem:[#allocation2 + $0x20] sm:$0xff] %vm211, %v296
          %313 = vst.msk [vmem:[#allocation2 + $0x28] sm:$0xff] %vm211, %v297
          %314 = vst.msk [vmem:[#allocation2 + $0x30] sm:$0xff] %vm211, %v298
          %315 = vst.msk [vmem:[#allocation2 + $0x38] sm:$0xff] %vm211, %v299
          %316 = vst.msk [vmem:[#allocation2 + $0x40] sm:$0xff] %vm211, %v300
          %317 = vst.msk [vmem:[#allocation2 + $0x48] sm:$0xff] %vm211, %v301
          %318 = vst.msk [vmem:[#allocation2 + $0x50] sm:$0xff] %vm211, %v302
          %319 = vst.msk [vmem:[#allocation2 + $0x58] sm:$0xff] %vm211, %v303
          %320 = vst.msk [vmem:[#allocation2 + $0x60] sm:$0xff] %vm211, %v304
          %321 = vst.msk [vmem:[#allocation2 + $0x68] sm:$0xff] %vm211, %v305
          %322 = vst.msk [vmem:[#allocation2 + $0x70] sm:$0xff] %vm211, %v306
          %323 = vst.msk [vmem:[#allocation2 + $0x78] sm:$0xff] %vm211, %v307
        $region32: #{tpu_custom_call.1} parent=27 // pred_fallthru
          _
        %v324 = vld [vmem:[%s168] sm:$0xff]
        %v325 = vmul.f32 %v324, %v324
        %vm326 = vcmask 326656
        %v327 = vsel %vm326, %v325, 0.0
        %328 = vadd.xlane.f32.xlu0 %v327
        %v329 = vpop.xlane.xlu0 %328
        %v330 = vmax.f32 %v329, 1e-24
        %v331 = vrsqrt.pop %v330
        %v332 = vmul.f32 %v324, %v331
        %v333 = vld [vmem:[#allocation2] sm:$0xff]
        %v334 = vld [vmem:[#allocation2 + $0x8] sm:$0xff]
        %v335 = vld [vmem:[#allocation2 + $0x10] sm:$0xff]
        %v336 = vld [vmem:[#allocation2 + $0x18] sm:$0xff]
        %v337 = vld [vmem:[#allocation2 + $0x20] sm:$0xff]
        %v338 = vld [vmem:[#allocation2 + $0x28] sm:$0xff]
        %v339 = vld [vmem:[#allocation2 + $0x30] sm:$0xff]
        %v340 = vld [vmem:[#allocation2 + $0x38] sm:$0xff]
        %v341 = vld [vmem:[#allocation2 + $0x40] sm:$0xff]
        %v342 = vld [vmem:[#allocation2 + $0x48] sm:$0xff]
        %v343 = vld [vmem:[#allocation2 + $0x50] sm:$0xff]
        %v344 = vld [vmem:[#allocation2 + $0x58] sm:$0xff]
        %v345 = vld [vmem:[#allocation2 + $0x60] sm:$0xff]
        %v346 = vld [vmem:[#allocation2 + $0x68] sm:$0xff]
        %v347 = vld [vmem:[#allocation2 + $0x70] sm:$0xff]
        %v348 = vld [vmem:[#allocation2 + $0x78] sm:$0xff]
        %v350 = vsel %vm326, %v332, 0
        %v353 = vsel %vm326, %v333, 0
        %v356 = vsel %vm326, %v334, 0
        %v359 = vsel %vm326, %v335, 0
        %v362 = vsel %vm326, %v336, 0
        %v365 = vsel %vm326, %v337, 0
        %v368 = vsel %vm326, %v338, 0
        %v371 = vsel %vm326, %v339, 0
        %v374 = vsel %vm326, %v340, 0
        %v377 = vsel %vm326, %v341, 0
        %v380 = vsel %vm326, %v342, 0
        %v383 = vsel %vm326, %v343, 0
        %v386 = vsel %vm326, %v344, 0
        %v389 = vsel %vm326, %v345, 0
        %v392 = vsel %vm326, %v346, 0
        %v395 = vsel %vm326, %v347, 0
        %v398 = vsel %vm326, %v348, 0
        %400 = vmatprep.subr.mxu0 0.0
        %401 = vmatpush1.xpose.msra.mxu0 %v353
        %402 = vmatprep.subr.mxu0 0.0
        %403 = vmatpush1.xpose.msra.mxu0 %v356
        %404 = vmatprep.subr.mxu0 0.0
        %405 = vmatpush1.xpose.msra.mxu0 %v359
        %406 = vmatprep.subr.mxu0 0.0
        %407 = vmatpush1.xpose.msra.mxu0 %v362
        %408 = vmatprep.subr.mxu0 0.0
        %409 = vmatpush1.xpose.msra.mxu0 %v365
        %410 = vmatprep.subr.mxu0 0.0
        %411 = vmatpush1.xpose.msra.mxu0 %v368
        %412 = vmatprep.subr.mxu0 0.0
        %413 = vmatpush1.xpose.msra.mxu0 %v371
        %414 = vmatprep.subr.mxu0 0.0
        %415 = vmatpush1.xpose.msra.mxu0 %v374
        %416 = vmatprep.subr.mxu0 0.0
        %417 = vmatpush1.xpose.msra.mxu0 %v377
        %418 = vmatprep.subr.mxu0 0.0
        %419 = vmatpush1.xpose.msra.mxu0 %v380
        %420 = vmatprep.subr.mxu0 0.0
        %421 = vmatpush1.xpose.msra.mxu0 %v383
        %422 = vmatprep.subr.mxu0 0.0
        %423 = vmatpush1.xpose.msra.mxu0 %v386
        %424 = vmatprep.subr.mxu0 0.0
        %425 = vmatpush1.xpose.msra.mxu0 %v389
        %426 = vmatprep.subr.mxu0 0.0
        %427 = vmatpush1.xpose.msra.mxu0 %v392
        %428 = vmatprep.subr.mxu0 0.0
        %429 = vmatpush1.xpose.msra.mxu0 %v395
        %430 = vmatprep.subr.mxu0 0.0
        %431 = vmatpush1.xpose.msra.mxu0 %v398
        %432 = vmatprep.subr.mxu0 0.0
        %433 = vmatpush1.xpose.msra.mxu0 0.0
        %434 = vmatprep.subr.mxu0 0.0
        %435 = vmatpush1.xpose.msra.mxu0 0.0
        %436 = vmatprep.subr.mxu0 0.0
        %437 = vmatpush1.xpose.msra.mxu0 0.0
        %438 = vmatprep.subr.mxu0 0.0
        %439 = vmatpush1.xpose.msra.mxu0 0.0
        %440 = vmatprep.subr.mxu0 0.0
        %441 = vmatpush1.xpose.msra.mxu0 0.0
        %442 = vmatprep.subr.mxu0 0.0
        %443 = vmatpush1.xpose.msra.mxu0 0.0
        %444 = vmatprep.subr.mxu0 0.0
        %445 = vmatpush1.xpose.msra.mxu0 0.0
        %446 = vmatprep.subr.mxu0 0.0
        %447 = vmatpush1.xpose.msra.mxu0 0.0
        %448 = vmatprep.subr.mxu0 0.0
        %449 = vmatpush1.xpose.msra.mxu0 0.0
        %450 = vmatprep.subr.mxu0 0.0
        %451 = vmatpush1.xpose.msra.mxu0 0.0
        %452 = vmatprep.subr.mxu0 0.0
        %453 = vmatpush1.xpose.msra.mxu0 0.0
        %454 = vmatprep.subr.mxu0 0.0
        %455 = vmatpush1.xpose.msra.mxu0 0.0
        %456 = vmatprep.subr.mxu0 0.0
        %457 = vmatpush1.xpose.msra.mxu0 0.0
        %458 = vmatprep.subr.mxu0 0.0
        %459 = vmatpush1.xpose.msra.mxu0 0.0
        %460 = vmatprep.subr.mxu0 0.0
        %461 = vmatpush1.xpose.msra.mxu0 0.0
        %462 = vmatprep.subr.mxu0 0.0
        %463 = vmatpush1.xpose.msra.mxu0 0.0
        %464 = vmatprep.mubr.f32.mxu0 0.0
        %465 = vmatmul.mubr.f32.gmra.mrb[0].mxu0 %v350
        %v466 = vpop.f32.mrb[0].mxu0
        %v467 = vadd.f32 0.0, %v466
        %v468 = vpop.f32.mrb[0].mxu0
        %469 = vdwg.mxu0
        %470 = vst [vmem:[%s164] sm:$0xff] %v467
        %s471 = sand.u32 %s90, 1
        %s472 = scalar_lea.sflag [#allocation4], %s471
        %s473 = sand.u32 %s90, 1
        %s474 = smul.addr %s473, 8
        %s475 = scalar_lea.vmem [#allocation3], %s474
        // Predicated region
        $region33: #{tpu_custom_call.1} parent=27 // pred_check
          %p476 = pneg %p100
        $region34: #{tpu_custom_call.1} parent=27 // pred_check_branch
          %478 = sbr.rel (%p476) target = $region36
        $region35: #{tpu_custom_call.1} parent=27 // pred_region
          %s480 = ssub.s32 128, 128
          %481 = vsyncadd %s472, %s480
          %s482 = smul.addr %s21, 3
          %s483 = sadd.s32 %s20, %s482
          %s484 = smul.addr %s483, 128
          %s485 = scalar_lea.hbm %s2, %s484
          %s487 = sshll.u32 %s475, 4
          %s488 = int_to_ptr.vmem [resolvable:$true] %s487
          %490 = dma.vmem_to_hbm [thread:$0]  %s488, 128, %s485, %s472
        $region36: #{tpu_custom_call.1} parent=27 // pred_fallthru
          _
      $region28: #{tpu_custom_call.1} parent=5 // pred_fallthru
        _
      %p491 = scmp.le.s32.totalorder 2, %s11
      // Predicated region
      $region37: #{tpu_custom_call.1} parent=5 // pred_check
        %p492 = pneg %p491
      $region38: #{tpu_custom_call.1} parent=5 // pred_check_branch
        %494 = sbr.rel (%p492) target = $region40
      $region39: #{tpu_custom_call.1} parent=5 // pred_region
        %s495 = ssub.s32 %s11, 2
        // Predicated region
        $region41: #{tpu_custom_call.1} parent=39 // pred_check
          %p496 = pneg %p106
        $region42: #{tpu_custom_call.1} parent=39 // pred_check_branch
          %498 = sbr.rel (%p496) target = $region44
        $region43: #{tpu_custom_call.1} parent=39 // pred_region
          %s499 = sand.u32 %s91, 1
          %s500 = scalar_lea.sflag [#allocation4], %s499
          %s501 = sand.u32 %s91, 1
          %s502 = smul.addr %s501, 8
          %s503 = scalar_lea.vmem [#allocation3], %s502
          %504 = dma.done %s500, 128
        $region44: #{tpu_custom_call.1} parent=39 // pred_fallthru
          _
      $region40: #{tpu_custom_call.1} parent=5 // pred_fallthru
        _
    $region6: #{tpu_custom_call.1} parent=1 // loop_footer
      %s15 = sadd.s32 1, %s11
    $region7: #{tpu_custom_call.1} parent=1 // loop_footer_branch
      %10 = sbr.rel target = $region3
    $region8: #{tpu_custom_call.1} parent=1 // loop_exit
      _
    %505 = vsyncpa [#allocation4], 1
    %s506 = scalar_lea.sflag [#allocation4], 1
    %507 = vsyncpa %s506, 1

</llo_original>
